<compile_context>
chip_gen: v7x
topology: tpu7x:2x2x1
jax: 0.10.0
libtpu: 0.0.40
codegen_flags: <defaults>
</compile_context>

<pallas_src>
from functools import partial

import numpy as np
import jax
import jax.numpy as jnp
from jax.experimental import pallas as pl
from jax.experimental.pallas import tpu as pltpu


# ----------------------------------------------------------------------------
# Skeleton topology helpers (host-side NumPy glue, mirrors SkeletonConv/Pool
# setup).  The original helper modules are not part of the prompt.
# ----------------------------------------------------------------------------
def find_neighbor(edges, dist):
    """Edges are neighbors if their graph distance (sharing joints) <= dist."""
    n = len(edges)
    D = np.full((n, n), 1e9, dtype=np.float64)
    np.fill_diagonal(D, 0.0)
    for i in range(n):
        for j in range(n):
            if i != j and (set(edges[i]) & set(edges[j])):
                D[i, j] = 1.0
    for k in range(n):
        D = np.minimum(D, D[:, k:k + 1] + D[k:k + 1, :])
    return [[j for j in range(n) if D[i, j] <= dist] for i in range(n)]


def make_pool(edges, last_pool):
    # TODO(synk): original SkeletonPool does degree-based chain discovery; for
    # a chain skeleton this pairwise merge is equivalent (mean pooling mode).
    n = len(edges)
    if last_pool:
        return [list(range(n))], [(edges[0][0], edges[-1][1])]
    pooling_list, new_edges = [], []
    i = 0
    while i < n:
        if i + 1 < n:
            pooling_list.append([i, i + 1])
            new_edges.append((edges[i][0], edges[i + 1][1]))
            i += 2
        else:
            pooling_list.append([i])
            new_edges.append(edges[i])
            i += 1
    return pooling_list, new_edges


def build_pool_weight(pooling_list, old_edge_num, cpe):
    W = np.zeros((len(pooling_list) * cpe, old_edge_num * cpe), dtype=np.float32)
    for i, group in enumerate(pooling_list):
        for j in group:
            for c in range(cpe):
                W[i * cpe + c, j * cpe + c] = 1.0 / len(group)
    return W


def build_conv_mask(neighbor_list, in_ch, out_ch, joint_num, K):
    in_per = in_ch // joint_num
    out_per = out_ch // joint_num
    mask = np.zeros((out_ch, in_ch, K), dtype=np.float32)
    for co in range(out_ch):
        e_out = co // out_per
        for ci in range(in_ch):
            if (ci // in_per) in neighbor_list[e_out]:
                mask[co, ci, :] = 1.0
    return mask


def build_dense_conv_pool_operator(wcp, T_in, T_out, K, stride, pad):
    """Exact dense operator A with
       A[cn*T_out + t, ci*T_in + tau] = sum_k wcp[cn,ci,k] * [tau == s*t+k-pad]
    i.e. zero-padded strided conv (pool already folded into wcp)."""
    Cnew, Cin, _ = wcp.shape
    A = np.zeros((Cnew * T_out, Cin * T_in), dtype=np.float32)
    for t in range(T_out):
        for k in range(K):
            tau = stride * t + k - pad
            if 0 <= tau < T_in:
                A[t::T_out, tau::T_in] += wcp[:, :, k]
    return A


# ----------------------------------------------------------------------------
# Fused Pallas kernel: all encoder layers, one lane-dense output slab.
# ----------------------------------------------------------------------------
def _make_encoder_kernel(num_layers, out_width):
    def kernel(*refs):
        # refs: x, [At, bf, Wz, bz] * num_layers, out_slab
        x_ref = refs[0]
        w_refs = refs[1:1 + 4 * num_layers]
        out_ref = refs[1 + 4 * num_layers]

        h = x_ref[...]                                    # (rows, Cin0*T0) f32
        segs = []
        for l in range(num_layers):
            at_ref, bf_ref, wz_ref, bz_ref = w_refs[4 * l:4 * l + 4]
            # fused SkeletonConv + mean SkeletonPool (+ pad/stride/im2col):
            # bf16 operands on the MXU, f32 accumulation / bias / activation.
            y = jnp.dot(h.astype(jnp.bfloat16), at_ref[...],
                        preferred_element_type=jnp.float32) + bf_ref[...]
            y = jnp.where(y > 0, y, 0.2 * y)              # LeakyReLU(0.2), f32
            # per-edge latent Linear as one block-diagonal matmul
            z = jnp.dot(y.astype(jnp.bfloat16), wz_ref[...],
                        preferred_element_type=jnp.float32) + bz_ref[...]
            segs.append(z)
            h = y

        # One lane-dense store: [h_final | z_0 | ... | z_{L-1} | zero pad],
        # out_width is a multiple of 128 so the store is unmasked.
        parts = [h] + segs
        total = sum(int(p.shape[-1]) for p in parts)
        if total < out_width:
            parts.append(jnp.zeros((h.shape[0], out_width - total),
                                   dtype=jnp.float32))
        out_ref[...] = jnp.concatenate(parts, axis=-1)
    return kernel


@partial(jax.jit, static_argnums=(2,))
def encoder_forward(x, layers, meta):
    """x: (B, Cin0, T0).  layers: tuple of dicts of fused arrays.
    meta: static tuple of (k_edges, 2L, Cnew, T_out) per layer."""
    B = x.shape[0]
    num_layers = len(layers)
    xf = x.reshape(B, -1).astype(jnp.float32)             # NCT flat -> ci*T + t

    # --- batch (matmul M) padding: at least one full f32 sublane tile ------
    B_pad = max(8, ((B + 7) // 8) * 8)
    if B_pad > 128:
        block_rows = 128                                   # block batch; v7x
        B_pad = ((B_pad + 127) // 128) * 128               # gets both cores
    else:
        block_rows = B_pad
    if B_pad != B:
        xf = jnp.pad(xf, ((0, B_pad - B), (0, 0)))
    grid = (B_pad // block_rows,)

    # --- single lane-dense output slab layout ------------------------------
    _, _, c_last, t_last = meta[-1]
    width_h = c_last * t_last
    widths_z = [ke * two_l for (ke, two_l, _, _) in meta]
    total = width_h + sum(widths_z)
    out_width = ((total + 127) // 128) * 128

    inputs = [xf]
    in_specs = [pl.BlockSpec((block_rows, xf.shape[1]), lambda i: (i, 0))]
    for p in layers:
        for name in ("At", "bf", "Wz", "bz"):
            inputs.append(p[name])
            # block-invariant operands: whole-array VMEM residency, no
            # (pointless) double-buffering.
            in_specs.append(pl.BlockSpec(memory_space=pltpu.MemorySpace.VMEM))

    slab = pl.pallas_call(
        _make_encoder_kernel(num_layers, out_width),
        grid=grid,
        out_shape=jax.ShapeDtypeStruct((B_pad, out_width), jnp.float32),
        in_specs=in_specs,
        out_specs=pl.BlockSpec((block_rows, out_width), lambda i: (i, 0)),
        compiler_params=pltpu.CompilerParams(
            dimension_semantics=("parallel",)),
    )(*inputs)

    out = slab[:B, :width_h].reshape(B, c_last, t_last)
    z_list = []
    off = width_h
    for (ke, two_l, _, _) in meta:
        z_list.append(slab[:B, off:off + ke * two_l].reshape(B, ke, two_l))
        off += ke * two_l
    return out, z_list


# ----------------------------------------------------------------------------
# Parameter construction (deterministic synthetic init, mirrors Encoder.__init__)
# ----------------------------------------------------------------------------
def init_encoder(key, args, topology):
    num_layers = args['num_layers']
    K = args['kernel_size']
    pad = (K - 1) // 2
    seq_len = args['train_seq_len']

    channel_base = [6]
    timestep_list = [seq_len]
    for i in range(num_layers):
        channel_base.append(channel_base[-1] * 2)
        if seq_len == 8:
            timestep_list.append(timestep_list[-1]
                                 if (i == 0 or i == num_layers - 1)
                                 else timestep_list[-1] // 2)
        elif seq_len == 16:
            timestep_list.append(timestep_list[-1] if i == 0
                                 else timestep_list[-1] // 2)
        else:
            timestep_list.append(timestep_list[-1] // 2)

    topologies = [list(topology)]
    edge_num = [len(topology)]
    layers_ref, layers_pallas, meta = [], [], []
    T_in = seq_len

    for i in range(num_layers):
        neighbor_list = find_neighbor(topologies[i], args['skeleton_dist'])
        in_ch = channel_base[i] * edge_num[i]
        out_ch = channel_base[i + 1] * edge_num[i]
        if seq_len == 8:
            stride = 1 if (i == 0 or i == num_layers - 1) else 2
        elif seq_len == 16:
            stride = 1 if i == 0 else 2
        else:
            stride = 2

        key, k1, k2, k3, k4 = jax.random.split(key, 5)
        w = np.asarray(jax.random.normal(k1, (out_ch, in_ch, K),
                                         dtype=jnp.float32)) * 0.1
        mask = build_conv_mask(neighbor_list, in_ch, out_ch, edge_num[i], K)
        wconv = (w * mask).astype(np.float32)              # masked SkeletonConv
        bconv = np.asarray(jax.random.normal(k2, (out_ch,),
                                             dtype=jnp.float32)) * 0.05

        last_pool = (i == num_layers - 1)
        cpe = out_ch // len(neighbor_list)                 # == channel_base[i+1]
        pooling_list, new_edges = make_pool(topologies[i], last_pool)
        wpool = build_pool_weight(pooling_list, edge_num[i], cpe)
        Cnew = wpool.shape[0]
        k_edges = Cnew // channel_base[i + 1]

        T_out = (T_in + 2 * pad - K) // stride + 1
        in_feat = channel_base[i + 1] * timestep_list[i + 1]
        assert in_feat == channel_base[i + 1] * T_out
        two_l = (args['shallow_latent_d'] if i == 0 else args['latent_d']) * 2
        wlin = np.asarray(jax.random.normal(k3, (in_feat, two_l),
                                            dtype=jnp.float32)) * 0.05
        blin = np.asarray(jax.random.normal(k4, (1, two_l),
                                            dtype=jnp.float32)) * 0.05

        # ---- un-fused params (pure-jnp f32 reference path) ----
        layers_ref.append(dict(
            K=K, pad=pad, stride=stride,
            wconv2d=jnp.asarray(wconv.reshape(out_ch, in_ch * K)),
            bconv=jnp.asarray(bconv.reshape(out_ch, 1)),
            wpool=jnp.asarray(wpool),
            wlin=jnp.asarray(wlin), blin=jnp.asarray(blin),
            cb_next=channel_base[i + 1],
        ))

        # ---- fused dense operators (Pallas path) ----
        # Fold mean pool into the masked conv weight (exact: pool is linear
        # and applied before the LeakyReLU in the original nn.Sequential),
        # then fold pad/stride/im2col into A.
        wcp = np.einsum('nc,cik->nik', wpool, wconv).astype(np.float32)
        bcp = (wpool @ bconv).astype(np.float32)
        A = build_dense_conv_pool_operator(wcp, T_in, T_out, K, stride, pad)
        bf = np.repeat(bcp, T_out).reshape(1, Cnew * T_out).astype(np.float32)
        F = channel_base[i + 1] * T_out
        Wz = np.zeros((Cnew * T_out, k_edges * two_l), dtype=np.float32)
        for e in range(k_edges):
            Wz[e * F:(e + 1) * F, e * two_l:(e + 1) * two_l] = wlin
        bz = np.tile(blin, (1, k_edges)).astype(np.float32)

        layers_pallas.append(dict(
            At=jnp.asarray(A.T, dtype=jnp.bfloat16),       # bf16 MXU operands
            bf=jnp.asarray(bf),                            # f32 bias
            Wz=jnp.asarray(Wz, dtype=jnp.bfloat16),
            bz=jnp.asarray(bz),
        ))
        meta.append((int(k_edges), int(two_l), int(Cnew), int(T_out)))

        topologies.append(new_edges)
        edge_num.append(len(new_edges))
        T_in = T_out

    return dict(layers_pallas=tuple(layers_pallas), layers_ref=layers_ref,
                meta=tuple(meta), channel_base=channel_base,
                edge_num=edge_num, timestep_list=timestep_list)


# ----------------------------------------------------------------------------
# Pure-jnp reference with the ORIGINAL un-fused f32 weights (validates fusion)
# ----------------------------------------------------------------------------
def im2col(x, K, stride, pad):
    B, C, T = x.shape
    xp = jnp.pad(x, ((0, 0), (0, 0), (pad, pad)))          # padding_mode='zeros'
    T_out = (T + 2 * pad - K) // stride + 1
    cols = [xp[:, :, k: k + stride * T_out: stride] for k in range(K)]
    patches = jnp.stack(cols, axis=2)                      # (B, C, K, T_out)
    return patches.reshape(B, C * K, T_out)


def encoder_forward_ref(x, layers_ref):
    z_list = []
    for p in layers_ref:
        patches = im2col(x, p['K'], p['stride'], p['pad'])
        conv = jnp.einsum('oc,bct->bot', p['wconv2d'], patches) + p['bconv'][None]
        pooled = jnp.einsum('nc,bct->bnt', p['wpool'], conv)
        y = jnp.where(pooled > 0, pooled, 0.2 * pooled)
        B, Cnew, T = y.shape
        k_edges = Cnew // p['cb_next']
        feat = y.reshape(B, k_edges, p['cb_next'] * T)      # == input.view(bs,k,-1)
        z = feat @ p['wlin'] + p['blin'][None]
        z_list.append(z)
        x = y
    return x, z_list


# ----------------------------------------------------------------------------
if __name__ == "__main__":
    args = dict(
        latent_d=16,
        shallow_latent_d=8,
        train_seq_len=8,
        kernel_size=3,
        num_layers=2,
        skeleton_dist=1,
        extra_conv=0,
        skeleton_pool='mean',
        padding_mode='zeros',
    )
    # simple 7-joint chain skeleton -> 6 edges
    topology = [(0, 1), (1, 2), (2, 3), (3, 4), (4, 5), (5, 6)]

    key = jax.random.PRNGKey(0)
    key, kx = jax.random.split(key)
    enc = init_encoder(key, args, topology)

    B = 2
    in_channels = enc['channel_base'][0] * enc['edge_num'][0]   # 6 * 6 = 36
    T = args['train_seq_len']                                   # 8
    x = jax.random.normal(kx, (B, in_channels, T), dtype=jnp.float32)

    out, z_list = encoder_forward(x, enc['layers_pallas'], enc['meta'])
    out = jax.block_until_ready(out)
    z_list = [jax.block_until_ready(z) for z in z_list]

    # sanity check against pure-jnp f32 reference using the un-fused weights
    # (tolerance relaxed for the bf16 MXU operands; accumulation stays f32)
    out_ref, z_ref = encoder_forward_ref(x, enc['layers_ref'])
    np.testing.assert_allclose(np.asarray(out), np.asarray(out_ref),
                               rtol=3e-2, atol=3e-2)
    for z, zr in zip(z_list, z_ref):
        np.testing.assert_allclose(np.asarray(z), np.asarray(zr),
                                   rtol=3e-2, atol=3e-2)

    print("KERNEL_OK")
</pallas_src>

<mosaic_0001>
module attributes {stable_mosaic.version = 11 : i64} {
  func.func @kernel(%arg0: i32, %arg1: memref<8x288xf32, #tpu.memory_space<vmem>>, %arg2: memref<288x288xbf16, #tpu.memory_space<vmem>>, %arg3: memref<1x288xf32, #tpu.memory_space<vmem>>, %arg4: memref<288x48xbf16, #tpu.memory_space<vmem>>, %arg5: memref<1x48xf32, #tpu.memory_space<vmem>>, %arg6: memref<288x192xbf16, #tpu.memory_space<vmem>>, %arg7: memref<1x192xf32, #tpu.memory_space<vmem>>, %arg8: memref<192x32xbf16, #tpu.memory_space<vmem>>, %arg9: memref<1x32xf32, #tpu.memory_space<vmem>>, %arg10: memref<8x384xf32, #tpu.memory_space<vmem>>) attributes {dimension_semantics = [#tpu.dimension_semantics<parallel>], iteration_bounds = array<i64: 1>, scalar_prefetch = 0 : i64, scratch_operands = 0 : i64, tpu.core_type = #tpu.core_type<tc>, window_params = [{transform_indices = @transform_0, window_bounds = array<i64: 8, 288>}, {pipeline_mode = #tpu.pipeline_mode<synchronous>, transform_indices = @transform_1, window_bounds = array<i64: 288, 288>}, {pipeline_mode = #tpu.pipeline_mode<synchronous>, transform_indices = @transform_2, window_bounds = array<i64: 1, 288>}, {pipeline_mode = #tpu.pipeline_mode<synchronous>, transform_indices = @transform_3, window_bounds = array<i64: 288, 48>}, {pipeline_mode = #tpu.pipeline_mode<synchronous>, transform_indices = @transform_4, window_bounds = array<i64: 1, 48>}, {pipeline_mode = #tpu.pipeline_mode<synchronous>, transform_indices = @transform_5, window_bounds = array<i64: 288, 192>}, {pipeline_mode = #tpu.pipeline_mode<synchronous>, transform_indices = @transform_6, window_bounds = array<i64: 1, 192>}, {pipeline_mode = #tpu.pipeline_mode<synchronous>, transform_indices = @transform_7, window_bounds = array<i64: 192, 32>}, {pipeline_mode = #tpu.pipeline_mode<synchronous>, transform_indices = @transform_8, window_bounds = array<i64: 1, 32>}, {transform_indices = @transform_9, window_bounds = array<i64: 8, 384>}]} {
    %c0 = arith.constant 0 : index
    %c0_0 = arith.constant 0 : index
    %0 = vector.load %arg1[%c0, %c0_0] : memref<8x288xf32, #tpu.memory_space<vmem>>, vector<8x288xf32>
    %1 = arith.truncf %0 : vector<8x288xf32> to vector<8x288xbf16>
    %c0_1 = arith.constant 0 : index
    %c0_2 = arith.constant 0 : index
    %2 = vector.load %arg2[%c0_1, %c0_2] : memref<288x288xbf16, #tpu.memory_space<vmem>>, vector<288x288xbf16>
    %cst = arith.constant dense<0.000000e+00> : vector<8x288xf32>
    %3 = tpu.matmul %1, %2, %cst {dimension_numbers = #tpu.dot_dimension_numbers<[1], [0], [0], [1], [0, 0, 1, 1], [], []>} : vector<8x288xbf16>, vector<288x288xbf16>, vector<8x288xf32> -> vector<8x288xf32>
    %c0_3 = arith.constant 0 : index
    %c0_4 = arith.constant 0 : index
    %4 = vector.load %arg3[%c0_3, %c0_4] : memref<1x288xf32, #tpu.memory_space<vmem>>, vector<1x288xf32>
    %5 = vector.broadcast %4 : vector<1x288xf32> to vector<8x288xf32>
    %6 = arith.addf %3, %5 : vector<8x288xf32>
    %cst_5 = arith.constant 0.000000e+00 : f32
    %7 = vector.broadcast %cst_5 : f32 to vector<8x288xf32>
    %8 = arith.cmpf ogt, %6, %7 : vector<8x288xf32>
    %cst_6 = arith.constant 2.000000e-01 : f32
    %9 = vector.broadcast %cst_6 : f32 to vector<8x288xf32>
    %10 = arith.mulf %9, %6 : vector<8x288xf32>
    %11 = arith.select %8, %6, %10 : vector<8x288xi1>, vector<8x288xf32>
    %12 = arith.truncf %11 : vector<8x288xf32> to vector<8x288xbf16>
    %c0_7 = arith.constant 0 : index
    %c0_8 = arith.constant 0 : index
    %13 = vector.load %arg4[%c0_7, %c0_8] : memref<288x48xbf16, #tpu.memory_space<vmem>>, vector<288x48xbf16>
    %cst_9 = arith.constant dense<0.000000e+00> : vector<8x48xf32>
    %14 = tpu.matmul %12, %13, %cst_9 {dimension_numbers = #tpu.dot_dimension_numbers<[1], [0], [0], [1], [0, 0, 1, 1], [], []>} : vector<8x288xbf16>, vector<288x48xbf16>, vector<8x48xf32> -> vector<8x48xf32>
    %c0_10 = arith.constant 0 : index
    %c0_11 = arith.constant 0 : index
    %15 = vector.load %arg5[%c0_10, %c0_11] : memref<1x48xf32, #tpu.memory_space<vmem>>, vector<1x48xf32>
    %16 = vector.broadcast %15 : vector<1x48xf32> to vector<8x48xf32>
    %17 = arith.addf %14, %16 : vector<8x48xf32>
    %18 = arith.truncf %11 : vector<8x288xf32> to vector<8x288xbf16>
    %c0_12 = arith.constant 0 : index
    %c0_13 = arith.constant 0 : index
    %19 = vector.load %arg6[%c0_12, %c0_13] : memref<288x192xbf16, #tpu.memory_space<vmem>>, vector<288x192xbf16>
    %cst_14 = arith.constant dense<0.000000e+00> : vector<8x192xf32>
    %20 = tpu.matmul %18, %19, %cst_14 {dimension_numbers = #tpu.dot_dimension_numbers<[1], [0], [0], [1], [0, 0, 1, 1], [], []>} : vector<8x288xbf16>, vector<288x192xbf16>, vector<8x192xf32> -> vector<8x192xf32>
    %c0_15 = arith.constant 0 : index
    %c0_16 = arith.constant 0 : index
    %21 = vector.load %arg7[%c0_15, %c0_16] : memref<1x192xf32, #tpu.memory_space<vmem>>, vector<1x192xf32>
    %22 = vector.broadcast %21 : vector<1x192xf32> to vector<8x192xf32>
    %23 = arith.addf %20, %22 : vector<8x192xf32>
    %cst_17 = arith.constant 0.000000e+00 : f32
    %24 = vector.broadcast %cst_17 : f32 to vector<8x192xf32>
    %25 = arith.cmpf ogt, %23, %24 : vector<8x192xf32>
    %cst_18 = arith.constant 2.000000e-01 : f32
    %26 = vector.broadcast %cst_18 : f32 to vector<8x192xf32>
    %27 = arith.mulf %26, %23 : vector<8x192xf32>
    %28 = arith.select %25, %23, %27 : vector<8x192xi1>, vector<8x192xf32>
    %29 = arith.truncf %28 : vector<8x192xf32> to vector<8x192xbf16>
    %c0_19 = arith.constant 0 : index
    %c0_20 = arith.constant 0 : index
    %30 = vector.load %arg8[%c0_19, %c0_20] : memref<192x32xbf16, #tpu.memory_space<vmem>>, vector<192x32xbf16>
    %cst_21 = arith.constant dense<0.000000e+00> : vector<8x32xf32>
    %31 = tpu.matmul %29, %30, %cst_21 {dimension_numbers = #tpu.dot_dimension_numbers<[1], [0], [0], [1], [0, 0, 1, 1], [], []>} : vector<8x192xbf16>, vector<192x32xbf16>, vector<8x32xf32> -> vector<8x32xf32>
    %c0_22 = arith.constant 0 : index
    %c0_23 = arith.constant 0 : index
    %32 = vector.load %arg9[%c0_22, %c0_23] : memref<1x32xf32, #tpu.memory_space<vmem>>, vector<1x32xf32>
    %33 = vector.broadcast %32 : vector<1x32xf32> to vector<8x32xf32>
    %34 = arith.addf %31, %33 : vector<8x32xf32>
    %cst_24 = arith.constant 0.000000e+00 : f32
    %35 = vector.broadcast %cst_24 : f32 to vector<8x112xf32>
    %36 = tpu.concatenate %28, %17, %34, %35 in 1 : vector<8x192xf32>, vector<8x48xf32>, vector<8x32xf32>, vector<8x112xf32> -> vector<8x384xf32>
    %c0_25 = arith.constant 0 : index
    %c0_26 = arith.constant 0 : index
    %37 = vector.load %arg10[%c0_25, %c0_26] : memref<8x384xf32, #tpu.memory_space<vmem>>, vector<8x384xf32>
    tpu.vector_store %arg10[%c0_25, %c0_26], %36 {strides = array<i32>} : memref<8x384xf32, #tpu.memory_space<vmem>>, vector<8x384xf32>,
    return
  }
  func.func @transform_0(%arg0: i32) -> (i32, i32) {
    %c0_i32 = arith.constant 0 : i32
    %c0_i32_0 = arith.constant 0 : i32
    return %arg0, %c0_i32 : i32, i32
  }
  func.func @transform_1(%arg0: i32) -> (i32, i32) {
    %c0_i32 = arith.constant 0 : i32
    %c0_i32_0 = arith.constant 0 : i32
    %c0_i32_1 = arith.constant 0 : i32
    return %c0_i32, %c0_i32_0 : i32, i32
  }
  func.func @transform_2(%arg0: i32) -> (i32, i32) {
    %c0_i32 = arith.constant 0 : i32
    %c0_i32_0 = arith.constant 0 : i32
    %c0_i32_1 = arith.constant 0 : i32
    return %c0_i32, %c0_i32_0 : i32, i32
  }
  func.func @transform_3(%arg0: i32) -> (i32, i32) {
    %c0_i32 = arith.constant 0 : i32
    %c0_i32_0 = arith.constant 0 : i32
    %c0_i32_1 = arith.constant 0 : i32
    return %c0_i32, %c0_i32_0 : i32, i32
  }
  func.func @transform_4(%arg0: i32) -> (i32, i32) {
    %c0_i32 = arith.constant 0 : i32
    %c0_i32_0 = arith.constant 0 : i32
    %c0_i32_1 = arith.constant 0 : i32
    return %c0_i32, %c0_i32_0 : i32, i32
  }
  func.func @transform_5(%arg0: i32) -> (i32, i32) {
    %c0_i32 = arith.constant 0 : i32
    %c0_i32_0 = arith.constant 0 : i32
    %c0_i32_1 = arith.constant 0 : i32
    return %c0_i32, %c0_i32_0 : i32, i32
  }
  func.func @transform_6(%arg0: i32) -> (i32, i32) {
    %c0_i32 = arith.constant 0 : i32
    %c0_i32_0 = arith.constant 0 : i32
    %c0_i32_1 = arith.constant 0 : i32
    return %c0_i32, %c0_i32_0 : i32, i32
  }
  func.func @transform_7(%arg0: i32) -> (i32, i32) {
    %c0_i32 = arith.constant 0 : i32
    %c0_i32_0 = arith.constant 0 : i32
    %c0_i32_1 = arith.constant 0 : i32
    return %c0_i32, %c0_i32_0 : i32, i32
  }
  func.func @transform_8(%arg0: i32) -> (i32, i32) {
    %c0_i32 = arith.constant 0 : i32
    %c0_i32_0 = arith.constant 0 : i32
    %c0_i32_1 = arith.constant 0 : i32
    return %c0_i32, %c0_i32_0 : i32, i32
  }
  func.func @transform_9(%arg0: i32) -> (i32, i32) {
    %c0_i32 = arith.constant 0 : i32
    %c0_i32_0 = arith.constant 0 : i32
    return %arg0, %c0_i32 : i32, i32
  }
}

</mosaic_0001>

<llo_original>
// kernel: encoder_forward.1
$region0: #{encoder_forward.1}
  #allocation0 [shape = 'u32[]', space=smem, size = 0x4, offset = 0x4, fixed_abs, tag = 'smem constant byte address 0x4 - core index']
  #allocation1 [shape = 'u32[144,128]{1,0:T(1,128)}', space=vmem, size = 0x12000, scoped, tag = 'internal scratch']
  %s0 = inlined_call_operand.vmem [shape: f32[8,288], index: 0, kind: input, shape index: {}]
  %s1 = inlined_call_operand.vmem [shape: bf16[288,288], index: 1, kind: input, shape index: {}]
  %s2 = inlined_call_operand.vmem [shape: f32[1,288], index: 2, kind: input, shape index: {}]
  %s3 = inlined_call_operand.vmem [shape: bf16[288,48], index: 3, kind: input, shape index: {}]
  %s4 = inlined_call_operand.vmem [shape: f32[1,48], index: 4, kind: input, shape index: {}]
  %s5 = inlined_call_operand.hbm [shape: bf16[288,192], index: 5, kind: input, shape index: {}]
  %s6 = inlined_call_operand.vmem [shape: f32[1,192], index: 6, kind: input, shape index: {}]
  %s7 = inlined_call_operand.vmem [shape: bf16[192,32], index: 7, kind: input, shape index: {}]
  %s8 = inlined_call_operand.vmem [shape: f32[1,32], index: 8, kind: input, shape index: {}]
  %s9 = inlined_call_operand.vmem [shape: f32[8,384], index: 9, kind: output, shape index: {}]
  %s10 = sld [smem:[#allocation0]]
  $region50: #{encoder_forward.1} parent=0
    _
  %s12 = ssub.s32 1, %s10
  %s13 = scalar_select 0, %s12, %s10
  $region1: #{encoder_forward.1} parent=0
    #allocation2 [shape = 'u8[147456]{0}', space=vmem, size = 0x24000, scoped, tag = 'input window, operand 5, single buffered']
    #allocation3 [shape = 's32[1]{0}', space=sflag, size = 0x4, scoped, tag = 'scoped memory for encoder_forward.1']
    %14 = vsyncpa [#allocation3], 0
    // Predicated region
    $region2: #{encoder_forward.1} parent=1 // pred_check
      _
    $region3: #{encoder_forward.1} parent=1 // pred_check_branch
      %16 = sbr.rel (0) target = $region5
    $region4: #{encoder_forward.1} parent=1 // pred_region
      _
    $region5: #{encoder_forward.1} parent=1 // pred_fallthru
      _
    // Predicated region
    $region6: #{encoder_forward.1} parent=1 // pred_check
      _
    $region7: #{encoder_forward.1} parent=1 // pred_check_branch
      %18 = sbr.rel (0) target = $region9
    $region8: #{encoder_forward.1} parent=1 // pred_region
      _
    $region9: #{encoder_forward.1} parent=1 // pred_fallthru
      _
    // Predicated region
    $region10: #{encoder_forward.1} parent=1 // pred_check
      _
    $region11: #{encoder_forward.1} parent=1 // pred_check_branch
      %20 = sbr.rel (0) target = $region13
    $region12: #{encoder_forward.1} parent=1 // pred_region
      _
    $region13: #{encoder_forward.1} parent=1 // pred_fallthru
      _
    // Predicated region
    $region14: #{encoder_forward.1} parent=1 // pred_check
      _
    $region15: #{encoder_forward.1} parent=1 // pred_check_branch
      %22 = sbr.rel (0) target = $region17
    $region16: #{encoder_forward.1} parent=1 // pred_region
      _
    $region17: #{encoder_forward.1} parent=1 // pred_fallthru
      _
    // Predicated region
    $region18: #{encoder_forward.1} parent=1 // pred_check
      _
    $region19: #{encoder_forward.1} parent=1 // pred_check_branch
      %24 = sbr.rel (0) target = $region21
    $region20: #{encoder_forward.1} parent=1 // pred_region
      _
    $region21: #{encoder_forward.1} parent=1 // pred_fallthru
      _
    // Predicated region
    $region22: #{encoder_forward.1} parent=1 // pred_check
      _
    $region23: #{encoder_forward.1} parent=1 // pred_check_branch
      %26 = sbr.rel (0) target = $region25
    $region24: #{encoder_forward.1} parent=1 // pred_region
      %s28 = ssub.s32 4608, 4608
      %29 = vsyncadd [#allocation3], %s28
      %s30 = sshll.u32 [#allocation2], 4
      %s31 = int_to_ptr.vmem [resolvable:$true] %s30
      %36 = dma.hbm_to_vmem [thread:$0]  %s5, 4608, %s31, [#allocation3], 128, 128, 8
    $region25: #{encoder_forward.1} parent=1 // pred_fallthru
      _
    // Predicated region
    $region26: #{encoder_forward.1} parent=1 // pred_check
      _
    $region27: #{encoder_forward.1} parent=1 // pred_check_branch
      %38 = sbr.rel (0) target = $region29
    $region28: #{encoder_forward.1} parent=1 // pred_region
      _
    $region29: #{encoder_forward.1} parent=1 // pred_fallthru
      _
    // Predicated region
    $region30: #{encoder_forward.1} parent=1 // pred_check
      _
    $region31: #{encoder_forward.1} parent=1 // pred_check_branch
      %40 = sbr.rel (0) target = $region33
    $region32: #{encoder_forward.1} parent=1 // pred_region
      _
    $region33: #{encoder_forward.1} parent=1 // pred_fallthru
      _
    // Predicated region
    $region34: #{encoder_forward.1} parent=1 // pred_check
      _
    $region35: #{encoder_forward.1} parent=1 // pred_check_branch
      %42 = sbr.rel (0) target = $region37
    $region36: #{encoder_forward.1} parent=1 // pred_region
      _
    $region37: #{encoder_forward.1} parent=1 // pred_fallthru
      _
    // Predicated region
    $region38: #{encoder_forward.1} parent=1 // pred_check
      _
    $region39: #{encoder_forward.1} parent=1 // pred_check_branch
      %44 = sbr.rel (0) target = $region41
    $region40: #{encoder_forward.1} parent=1 // pred_region
      %45 = dma.done [#allocation3], 4608
    $region41: #{encoder_forward.1} parent=1 // pred_fallthru
      _
    %v47 = vld [vmem:[%s0] sm:$0xff]
    %v48 = vld [vmem:[%s0 + $0x8] sm:$0xff]
    %v49 = vld [vmem:[%s0 + $0x10] sm:$0xff]
    %v50 = vpack.c.bf16 %v47, %v47
    %v51 = vpack.c.bf16 %v48, %v48
    %v52 = vpack.c.bf16 %v49, %v49
    %v53 = vld [vmem:[%s1] sm:$0xff]
    %v54 = vld [vmem:[%s1 + $0x8] sm:$0xf]
    %v55 = vld [vmem:[%s1 + $0xc] sm:$0xff]
    %v56 = vld [vmem:[%s1 + $0x14] sm:$0xf]
    %v57 = vld [vmem:[%s1 + $0x18] sm:$0xff]
    %v58 = vld [vmem:[%s1 + $0x20] sm:$0xf]
    %v59 = vld [vmem:[%s1 + $0x24] sm:$0xff]
    %v60 = vld [vmem:[%s1 + $0x2c] sm:$0xf]
    %v61 = vld [vmem:[%s1 + $0x30] sm:$0xff]
    %v62 = vld [vmem:[%s1 + $0x38] sm:$0xf]
    %v63 = vld [vmem:[%s1 + $0x3c] sm:$0xff]
    %v64 = vld [vmem:[%s1 + $0x44] sm:$0xf]
    %v65 = vld [vmem:[%s1 + $0x48] sm:$0xff]
    %v66 = vld [vmem:[%s1 + $0x50] sm:$0xf]
    %v67 = vld [vmem:[%s1 + $0x54] sm:$0xff]
    %v68 = vld [vmem:[%s1 + $0x5c] sm:$0xf]
    %v69 = vld [vmem:[%s1 + $0x60] sm:$0xff]
    %v70 = vld [vmem:[%s1 + $0x68] sm:$0xf]
    %v71 = vld [vmem:[%s1 + $0x6c] sm:$0xff]
    %v72 = vld [vmem:[%s1 + $0x74] sm:$0xf]
    %v73 = vld [vmem:[%s1 + $0x78] sm:$0xff]
    %v74 = vld [vmem:[%s1 + $0x80] sm:$0xf]
    %v75 = vld [vmem:[%s1 + $0x84] sm:$0xff]
    %v76 = vld [vmem:[%s1 + $0x8c] sm:$0xf]
    %v77 = vld [vmem:[%s1 + $0x90] sm:$0xff]
    %v78 = vld [vmem:[%s1 + $0x98] sm:$0xf]
    %v79 = vld [vmem:[%s1 + $0x9c] sm:$0xff]
    %v80 = vld [vmem:[%s1 + $0xa4] sm:$0xf]
    %v81 = vld [vmem:[%s1 + $0xa8] sm:$0xff]
    %v82 = vld [vmem:[%s1 + $0xb0] sm:$0xf]
    %v83 = vld [vmem:[%s1 + $0xb4] sm:$0xff]
    %v84 = vld [vmem:[%s1 + $0xbc] sm:$0xf]
    %v85 = vld [vmem:[%s1 + $0xc0] sm:$0xff]
    %v86 = vld [vmem:[%s1 + $0xc8] sm:$0xf]
    %v87 = vld [vmem:[%s1 + $0xcc] sm:$0xff]
    %v88 = vld [vmem:[%s1 + $0xd4] sm:$0xf]
    %v89 = vld [vmem:[%s1 + $0xd8] sm:$0xff]
    %v90 = vld [vmem:[%s1 + $0xe0] sm:$0xf]
    %v91 = vld [vmem:[%s1 + $0xe4] sm:$0xff]
    %v92 = vld [vmem:[%s1 + $0xec] sm:$0xf]
    %v93 = vld [vmem:[%s1 + $0xf0] sm:$0xff]
    %v94 = vld [vmem:[%s1 + $0xf8] sm:$0xf]
    %v95 = vld [vmem:[%s1 + $0xfc] sm:$0xff]
    %v96 = vld [vmem:[%s1 + $0x104] sm:$0xf]
    %v97 = vld [vmem:[%s1 + $0x108] sm:$0xff]
    %v98 = vld [vmem:[%s1 + $0x110] sm:$0xf]
    %v99 = vld [vmem:[%s1 + $0x114] sm:$0xff]
    %v100 = vld [vmem:[%s1 + $0x11c] sm:$0xf]
    %v101 = vld [vmem:[%s1 + $0x120] sm:$0xff]
    %v102 = vld [vmem:[%s1 + $0x128] sm:$0xf]
    %v103 = vld [vmem:[%s1 + $0x12c] sm:$0xff]
    %v104 = vld [vmem:[%s1 + $0x134] sm:$0xf]
    %v105 = vld [vmem:[%s1 + $0x138] sm:$0xff]
    %v106 = vld [vmem:[%s1 + $0x140] sm:$0xf]
    %v107 = vld [vmem:[%s1 + $0x144] sm:$0xff]
    %v108 = vld [vmem:[%s1 + $0x14c] sm:$0xf]
    %v109 = vld [vmem:[%s1 + $0x150] sm:$0xff]
    %v110 = vld [vmem:[%s1 + $0x158] sm:$0xf]
    %v111 = vld [vmem:[%s1 + $0x15c] sm:$0xff]
    %v112 = vld [vmem:[%s1 + $0x164] sm:$0xf]
    %v113 = vld [vmem:[%s1 + $0x168] sm:$0xff]
    %v114 = vld [vmem:[%s1 + $0x170] sm:$0xf]
    %v115 = vld [vmem:[%s1 + $0x174] sm:$0xff]
    %v116 = vld [vmem:[%s1 + $0x17c] sm:$0xf]
    %v117 = vld [vmem:[%s1 + $0x180] sm:$0xff]
    %v118 = vld [vmem:[%s1 + $0x188] sm:$0xf]
    %v119 = vld [vmem:[%s1 + $0x18c] sm:$0xff]
    %v120 = vld [vmem:[%s1 + $0x194] sm:$0xf]
    %v121 = vld [vmem:[%s1 + $0x198] sm:$0xff]
    %v122 = vld [vmem:[%s1 + $0x1a0] sm:$0xf]
    %v123 = vld [vmem:[%s1 + $0x1a4] sm:$0xff]
    %v124 = vld [vmem:[%s1 + $0x1ac] sm:$0xf]
    %v125 = vld [vmem:[%s2] sm:$0x7]
    %v127 = vlaneseq
    %v128 = vshrl.u32 %v127, 7
    %v129 = vsub.s32 0, %v128
    %v130 = vrot.slane %v125, %v129
    %v131 = vlaneseq
    %v132 = vshrl.u32 %v131, 7
    %v133 = vsub.s32 1, %v132
    %v134 = vrot.slane %v125, %v133
    %v135 = vlaneseq
    %v136 = vshrl.u32 %v135, 7
    %v137 = vsub.s32 2, %v136
    %v138 = vrot.slane %v125, %v137
    %v214 = vunpack.c.l.b16 %v53
    %v215 = vunpack.c.h.b16 %v53
    %v216 = vunpack.c.l.b16 %v54
    %v217 = vunpack.c.l.b16 %v55
    %v218 = vunpack.c.h.b16 %v55
    %v219 = vunpack.c.l.b16 %v56
    %v220 = vunpack.c.l.b16 %v57
    %v221 = vunpack.c.h.b16 %v57
    %v222 = vunpack.c.l.b16 %v58
    %v223 = vunpack.c.l.b16 %v59
    %v224 = vunpack.c.h.b16 %v59
    %v225 = vunpack.c.l.b16 %v60
    %v226 = vunpack.c.l.b16 %v61
    %v227 = vunpack.c.h.b16 %v61
    %v228 = vunpack.c.l.b16 %v62
    %v229 = vunpack.c.l.b16 %v63
    %v230 = vunpack.c.h.b16 %v63
    %v231 = vunpack.c.l.b16 %v64
    %v232 = vunpack.c.l.b16 %v65
    %v233 = vunpack.c.h.b16 %v65
    %v234 = vunpack.c.l.b16 %v66
    %v235 = vunpack.c.l.b16 %v67
    %v236 = vunpack.c.h.b16 %v67
    %v237 = vunpack.c.l.b16 %v68
    %v238 = vunpack.c.l.b16 %v69
    %v239 = vunpack.c.h.b16 %v69
    %v240 = vunpack.c.l.b16 %v70
    %v241 = vunpack.c.l.b16 %v71
    %v242 = vunpack.c.h.b16 %v71
    %v243 = vunpack.c.l.b16 %v72
    %v244 = vunpack.c.l.b16 %v73
    %v245 = vunpack.c.h.b16 %v73
    %v246 = vunpack.c.l.b16 %v74
    %v247 = vunpack.c.l.b16 %v75
    %v248 = vunpack.c.h.b16 %v75
    %v249 = vunpack.c.l.b16 %v76
    %v250 = vunpack.c.l.b16 %v77
    %v251 = vunpack.c.h.b16 %v77
    %v252 = vunpack.c.l.b16 %v78
    %v253 = vunpack.c.l.b16 %v79
    %v254 = vunpack.c.h.b16 %v79
    %v255 = vunpack.c.l.b16 %v80
    %v256 = vunpack.c.l.b16 %v81
    %v257 = vunpack.c.h.b16 %v81
    %v258 = vunpack.c.l.b16 %v82
    %v259 = vunpack.c.l.b16 %v83
    %v260 = vunpack.c.h.b16 %v83
    %v261 = vunpack.c.l.b16 %v84
    %v262 = vunpack.c.l.b16 %v85
    %v263 = vunpack.c.h.b16 %v85
    %v264 = vunpack.c.l.b16 %v86
    %v265 = vunpack.c.l.b16 %v87
    %v266 = vunpack.c.h.b16 %v87
    %v267 = vunpack.c.l.b16 %v88
    %v268 = vunpack.c.l.b16 %v89
    %v269 = vunpack.c.h.b16 %v89
    %v270 = vunpack.c.l.b16 %v90
    %v271 = vunpack.c.l.b16 %v91
    %v272 = vunpack.c.h.b16 %v91
    %v273 = vunpack.c.l.b16 %v92
    %v274 = vunpack.c.l.b16 %v93
    %v275 = vunpack.c.h.b16 %v93
    %v276 = vunpack.c.l.b16 %v94
    %v277 = vunpack.c.l.b16 %v95
    %v278 = vunpack.c.h.b16 %v95
    %v279 = vunpack.c.l.b16 %v96
    %v280 = vunpack.c.l.b16 %v97
    %v281 = vunpack.c.h.b16 %v97
    %v282 = vunpack.c.l.b16 %v98
    %v283 = vunpack.c.l.b16 %v99
    %v284 = vunpack.c.h.b16 %v99
    %v285 = vunpack.c.l.b16 %v100
    %v286 = vunpack.c.l.b16 %v101
    %v287 = vunpack.c.h.b16 %v101
    %v288 = vunpack.c.l.b16 %v102
    %v289 = vunpack.c.l.b16 %v103
    %v290 = vunpack.c.h.b16 %v103
    %v291 = vunpack.c.l.b16 %v104
    %v292 = vunpack.c.l.b16 %v105
    %v293 = vunpack.c.h.b16 %v105
    %v294 = vunpack.c.l.b16 %v106
    %v295 = vunpack.c.l.b16 %v107
    %v296 = vunpack.c.h.b16 %v107
    %v297 = vunpack.c.l.b16 %v108
    %v298 = vunpack.c.l.b16 %v109
    %v299 = vunpack.c.h.b16 %v109
    %v300 = vunpack.c.l.b16 %v110
    %v301 = vunpack.c.l.b16 %v111
    %v302 = vunpack.c.h.b16 %v111
    %v303 = vunpack.c.l.b16 %v112
    %v304 = vunpack.c.l.b16 %v113
    %v305 = vunpack.c.h.b16 %v113
    %v306 = vunpack.c.l.b16 %v114
    %v307 = vunpack.c.l.b16 %v115
    %v308 = vunpack.c.h.b16 %v115
    %v309 = vunpack.c.l.b16 %v116
    %v310 = vunpack.c.l.b16 %v117
    %v311 = vunpack.c.h.b16 %v117
    %v312 = vunpack.c.l.b16 %v118
    %v313 = vunpack.c.l.b16 %v119
    %v314 = vunpack.c.h.b16 %v119
    %v315 = vunpack.c.l.b16 %v120
    %v316 = vunpack.c.l.b16 %v121
    %v317 = vunpack.c.h.b16 %v121
    %v318 = vunpack.c.l.b16 %v122
    %v319 = vunpack.c.l.b16 %v123
    %v320 = vunpack.c.h.b16 %v123
    %v321 = vunpack.c.l.b16 %v124
    %v322 = vpack.c.b16 %v217, %v214
    %v323 = vpack.c.b16 %v218, %v215
    %v324 = vpack.c.b16 %v219, %v216
    %v325 = vpack.c.b16 %v223, %v220
    %v326 = vpack.c.b16 %v224, %v221
    %v327 = vpack.c.b16 %v225, %v222
    %v328 = vpack.c.b16 %v229, %v226
    %v329 = vpack.c.b16 %v230, %v227
    %v330 = vpack.c.b16 %v231, %v228
    %v331 = vpack.c.b16 %v235, %v232
    %v332 = vpack.c.b16 %v236, %v233
    %v333 = vpack.c.b16 %v237, %v234
    %v334 = vpack.c.b16 %v241, %v238
    %v335 = vpack.c.b16 %v242, %v239
    %v336 = vpack.c.b16 %v243, %v240
    %v337 = vpack.c.b16 %v247, %v244
    %v338 = vpack.c.b16 %v248, %v245
    %v339 = vpack.c.b16 %v249, %v246
    %v340 = vpack.c.b16 %v253, %v250
    %v341 = vpack.c.b16 %v254, %v251
    %v342 = vpack.c.b16 %v255, %v252
    %v343 = vpack.c.b16 %v259, %v256
    %v344 = vpack.c.b16 %v260, %v257
    %v345 = vpack.c.b16 %v261, %v258
    %v346 = vpack.c.b16 %v265, %v262
    %v347 = vpack.c.b16 %v266, %v263
    %v348 = vpack.c.b16 %v267, %v264
    %v349 = vpack.c.b16 %v271, %v268
    %v350 = vpack.c.b16 %v272, %v269
    %v351 = vpack.c.b16 %v273, %v270
    %v352 = vpack.c.b16 %v277, %v274
    %v353 = vpack.c.b16 %v278, %v275
    %v354 = vpack.c.b16 %v279, %v276
    %v355 = vpack.c.b16 %v283, %v280
    %v356 = vpack.c.b16 %v284, %v281
    %v357 = vpack.c.b16 %v285, %v282
    %v358 = vpack.c.b16 %v289, %v286
    %v359 = vpack.c.b16 %v290, %v287
    %v360 = vpack.c.b16 %v291, %v288
    %v361 = vpack.c.b16 %v295, %v292
    %v362 = vpack.c.b16 %v296, %v293
    %v363 = vpack.c.b16 %v297, %v294
    %v364 = vpack.c.b16 %v301, %v298
    %v365 = vpack.c.b16 %v302, %v299
    %v366 = vpack.c.b16 %v303, %v300
    %v367 = vpack.c.b16 %v307, %v304
    %v368 = vpack.c.b16 %v308, %v305
    %v369 = vpack.c.b16 %v309, %v306
    %v370 = vpack.c.b16 %v313, %v310
    %v371 = vpack.c.b16 %v314, %v311
    %v372 = vpack.c.b16 %v315, %v312
    %v373 = vpack.c.b16 %v319, %v316
    %v374 = vpack.c.b16 %v320, %v317
    %v375 = vpack.c.b16 %v321, %v318
    %vm430 = vcmask 261120
    %v432 = vsel %vm430, %v52, 0
    %434 = vmatprep.subr.bf16.mxu0 %v323
    %435 = vmatpush1.bf16.msra.mxu0 %v322
    %436 = vmatprep.subr.bf16.mxu0 %v326
    %437 = vmatpush1.bf16.msra.mxu0 %v325
    %438 = vmatprep.subr.bf16.mxu0 %v329
    %439 = vmatpush1.bf16.msra.mxu0 %v328
    %440 = vmatprep.subr.bf16.mxu0 %v332
    %441 = vmatpush1.bf16.msra.mxu0 %v331
    %442 = vmatprep.subr.bf16.mxu0 %v335
    %443 = vmatpush1.bf16.msra.mxu0 %v334
    %444 = vmatprep.subr.bf16.mxu0 %v338
    %445 = vmatpush1.bf16.msra.mxu0 %v337
    %446 = vmatprep.subr.bf16.mxu0 %v341
    %447 = vmatpush1.bf16.msra.mxu0 %v340
    %448 = vmatprep.subr.bf16.mxu0 %v344
    %449 = vmatpush1.bf16.msra.mxu0 %v343
    %450 = vmatprep.subr.bf16.mxu0 %v347
    %451 = vmatpush1.bf16.msra.mxu0 %v346
    %452 = vmatprep.subr.bf16.mxu0 %v350
    %453 = vmatpush1.bf16.msra.mxu0 %v349
    %454 = vmatprep.subr.bf16.mxu0 %v353
    %455 = vmatpush1.bf16.msra.mxu0 %v352
    %456 = vmatprep.subr.bf16.mxu0 %v356
    %457 = vmatpush1.bf16.msra.mxu0 %v355
    %458 = vmatprep.subr.bf16.mxu0 %v359
    %459 = vmatpush1.bf16.msra.mxu0 %v358
    %460 = vmatprep.subr.bf16.mxu0 %v362
    %461 = vmatpush1.bf16.msra.mxu0 %v361
    %462 = vmatprep.subr.bf16.mxu0 %v365
    %463 = vmatpush1.bf16.msra.mxu0 %v364
    %464 = vmatprep.subr.bf16.mxu0 %v368
    %465 = vmatpush1.bf16.msra.mxu0 %v367
    %466 = vmatprep.mubr.bf16.mxu0 %v51
    %467 = vmatmul.mubr.bf16.gmra.mrb[0].mxu0 %v50
    %v468 = vpop.f32.mrb[0].mxu0
    %v469 = vadd.f32 %v130, %v468
    %v470 = vpop.f32.mrb[0].mxu0
    %v471 = vadd.f32 %v134, %v470
    %v472 = vpop.f32.mrb[0].mxu0
    %v473 = vpop.f32.mrb[0].mxu0
    %474 = vdwg.mxu0
    %475 = vmatprep.subr.bf16.mxu0 %v371
    %476 = vmatpush1.bf16.msra.mxu0 %v370
    %477 = vmatprep.subr.bf16.mxu0 %v374
    %478 = vmatpush1.bf16.msra.mxu0 %v373
    %479 = vmatprep.subr.bf16.mxu0 0
    %480 = vmatpush1.bf16.msra.mxu0 0
    %481 = vmatprep.subr.bf16.mxu0 0
    %482 = vmatpush1.bf16.msra.mxu0 0
    %483 = vmatprep.subr.bf16.mxu0 0
    %484 = vmatpush1.bf16.msra.mxu0 0
    %485 = vmatprep.subr.bf16.mxu0 0
    %486 = vmatpush1.bf16.msra.mxu0 0
    %487 = vmatprep.subr.bf16.mxu0 0
    %488 = vmatpush1.bf16.msra.mxu0 0
    %489 = vmatprep.subr.bf16.mxu0 0
    %490 = vmatpush1.bf16.msra.mxu0 0
    %491 = vmatprep.subr.bf16.mxu0 0
    %492 = vmatpush1.bf16.msra.mxu0 0
    %493 = vmatprep.subr.bf16.mxu0 0
    %494 = vmatpush1.bf16.msra.mxu0 0
    %495 = vmatprep.subr.bf16.mxu0 0
    %496 = vmatpush1.bf16.msra.mxu0 0
    %497 = vmatprep.subr.bf16.mxu0 0
    %498 = vmatpush1.bf16.msra.mxu0 0
    %499 = vmatprep.subr.bf16.mxu0 0
    %500 = vmatpush1.bf16.msra.mxu0 0
    %501 = vmatprep.subr.bf16.mxu0 0
    %502 = vmatpush1.bf16.msra.mxu0 0
    %503 = vmatprep.subr.bf16.mxu0 0
    %504 = vmatpush1.bf16.msra.mxu0 0
    %505 = vmatprep.subr.bf16.mxu0 0
    %506 = vmatpush1.bf16.msra.mxu0 0
    %507 = vmatprep.mubr.bf16.mxu0 0
    %508 = vmatmul.mubr.bf16.gmra.mrb[0].mxu0 %v432
    %v509 = vpop.f32.mrb[0].mxu0
    %v510 = vadd.f32 %v469, %v509
    %v511 = vpop.f32.mrb[0].mxu0
    %v512 = vadd.f32 %v471, %v511
    %v513 = vpop.f32.mrb[0].mxu0
    %v514 = vpop.f32.mrb[0].mxu0
    %515 = vdwg.mxu0
    %516 = vmatprep.subr.bf16.mxu0 0
    %517 = vmatpush1.bf16.msra.mxu0 %v324
    %518 = vmatprep.subr.bf16.mxu0 0
    %519 = vmatpush1.bf16.msra.mxu0 %v327
    %520 = vmatprep.subr.bf16.mxu0 0
    %521 = vmatpush1.bf16.msra.mxu0 %v330
    %522 = vmatprep.subr.bf16.mxu0 0
    %523 = vmatpush1.bf16.msra.mxu0 %v333
    %524 = vmatprep.subr.bf16.mxu0 0
    %525 = vmatpush1.bf16.msra.mxu0 %v336
    %526 = vmatprep.subr.bf16.mxu0 0
    %527 = vmatpush1.bf16.msra.mxu0 %v339
    %528 = vmatprep.subr.bf16.mxu0 0
    %529 = vmatpush1.bf16.msra.mxu0 %v342
    %530 = vmatprep.subr.bf16.mxu0 0
    %531 = vmatpush1.bf16.msra.mxu0 %v345
    %532 = vmatprep.subr.bf16.mxu0 0
    %533 = vmatpush1.bf16.msra.mxu0 %v348
    %534 = vmatprep.subr.bf16.mxu0 0
    %535 = vmatpush1.bf16.msra.mxu0 %v351
    %536 = vmatprep.subr.bf16.mxu0 0
    %537 = vmatpush1.bf16.msra.mxu0 %v354
    %538 = vmatprep.subr.bf16.mxu0 0
    %539 = vmatpush1.bf16.msra.mxu0 %v357
    %540 = vmatprep.subr.bf16.mxu0 0
    %541 = vmatpush1.bf16.msra.mxu0 %v360
    %542 = vmatprep.subr.bf16.mxu0 0
    %543 = vmatpush1.bf16.msra.mxu0 %v363
    %544 = vmatprep.subr.bf16.mxu0 0
    %545 = vmatpush1.bf16.msra.mxu0 %v366
    %546 = vmatprep.subr.bf16.mxu0 0
    %547 = vmatpush1.bf16.msra.mxu0 %v369
    %548 = vmatprep.mubr.bf16.mxu0 %v51
    %549 = vmatmul.mubr.bf16.gmra.mrb[0].mxu0 %v50
    %v550 = vpop.f32.mrb[0].mxu0
    %v551 = vadd.f32 %v138, %v550
    %v552 = vpop.f32.mrb[0].mxu0
    %v553 = vpop.f32.mrb[0].mxu0
    %v554 = vpop.f32.mrb[0].mxu0
    %555 = vdwg.mxu0
    %556 = vmatprep.subr.bf16.mxu0 0
    %557 = vmatpush1.bf16.msra.mxu0 %v372
    %558 = vmatprep.subr.bf16.mxu0 0
    %559 = vmatpush1.bf16.msra.mxu0 %v375
    %560 = vmatprep.subr.bf16.mxu0 0
    %561 = vmatpush1.bf16.msra.mxu0 0
    %562 = vmatprep.subr.bf16.mxu0 0
    %563 = vmatpush1.bf16.msra.mxu0 0
    %564 = vmatprep.subr.bf16.mxu0 0
    %565 = vmatpush1.bf16.msra.mxu0 0
    %566 = vmatprep.subr.bf16.mxu0 0
    %567 = vmatpush1.bf16.msra.mxu0 0
    %568 = vmatprep.subr.bf16.mxu0 0
    %569 = vmatpush1.bf16.msra.mxu0 0
    %570 = vmatprep.subr.bf16.mxu0 0
    %571 = vmatpush1.bf16.msra.mxu0 0
    %572 = vmatprep.subr.bf16.mxu0 0
    %573 = vmatpush1.bf16.msra.mxu0 0
    %574 = vmatprep.subr.bf16.mxu0 0
    %575 = vmatpush1.bf16.msra.mxu0 0
    %576 = vmatprep.subr.bf16.mxu0 0
    %577 = vmatpush1.bf16.msra.mxu0 0
    %578 = vmatprep.subr.bf16.mxu0 0
    %579 = vmatpush1.bf16.msra.mxu0 0
    %580 = vmatprep.subr.bf16.mxu0 0
    %581 = vmatpush1.bf16.msra.mxu0 0
    %582 = vmatprep.subr.bf16.mxu0 0
    %583 = vmatpush1.bf16.msra.mxu0 0
    %584 = vmatprep.subr.bf16.mxu0 0
    %585 = vmatpush1.bf16.msra.mxu0 0
    %586 = vmatprep.subr.bf16.mxu0 0
    %587 = vmatpush1.bf16.msra.mxu0 0
    %588 = vmatprep.mubr.bf16.mxu0 0
    %589 = vmatmul.mubr.bf16.gmra.mrb[0].mxu0 %v432
    %v590 = vpop.f32.mrb[0].mxu0
    %v591 = vadd.f32 %v551, %v590
    %v592 = vpop.f32.mrb[0].mxu0
    %v593 = vpop.f32.mrb[0].mxu0
    %v594 = vpop.f32.mrb[0].mxu0
    %595 = vdwg.mxu0
    %vm596 = vcmp.gt.f32.partialorder %v510, 0.0
    %vm597 = vcmp.gt.f32.partialorder %v512, 0.0
    %vm598 = vcmp.gt.f32.partialorder %v591, 0.0
    %v599 = vmul.f32 %v510, 0.2
    %v600 = vmul.f32 %v512, 0.2
    %v601 = vmul.f32 %v591, 0.2
    %v602 = vsel %vm596, %v510, %v599
    %v603 = vsel %vm597, %v512, %v600
    %v604 = vsel %vm598, %v591, %v601
    %v605 = vpack.c.bf16 %v602, %v602
    %v606 = vpack.c.bf16 %v603, %v603
    %v607 = vpack.c.bf16 %v604, %v604
    %v608 = vld [vmem:[%s3] sm:$0xf]
    %v609 = vld [vmem:[%s3 + $0x4] sm:$0xf]
    %v610 = vld [vmem:[%s3 + $0x8] sm:$0xf]
    %v611 = vld [vmem:[%s3 + $0xc] sm:$0xf]
    %v612 = vld [vmem:[%s3 + $0x10] sm:$0xf]
    %v613 = vld [vmem:[%s3 + $0x14] sm:$0xf]
    %v614 = vld [vmem:[%s3 + $0x18] sm:$0xf]
    %v615 = vld [vmem:[%s3 + $0x1c] sm:$0xf]
    %v616 = vld [vmem:[%s3 + $0x20] sm:$0xf]
    %v617 = vld [vmem:[%s3 + $0x24] sm:$0xf]
    %v618 = vld [vmem:[%s3 + $0x28] sm:$0xf]
    %v619 = vld [vmem:[%s3 + $0x2c] sm:$0xf]
    %v620 = vld [vmem:[%s3 + $0x30] sm:$0xf]
    %v621 = vld [vmem:[%s3 + $0x34] sm:$0xf]
    %v622 = vld [vmem:[%s3 + $0x38] sm:$0xf]
    %v623 = vld [vmem:[%s3 + $0x3c] sm:$0xf]
    %v624 = vld [vmem:[%s3 + $0x40] sm:$0xf]
    %v625 = vld [vmem:[%s3 + $0x44] sm:$0xf]
    %v626 = vld [vmem:[%s3 + $0x48] sm:$0xf]
    %v627 = vld [vmem:[%s3 + $0x4c] sm:$0xf]
    %v628 = vld [vmem:[%s3 + $0x50] sm:$0xf]
    %v629 = vld [vmem:[%s3 + $0x54] sm:$0xf]
    %v630 = vld [vmem:[%s3 + $0x58] sm:$0xf]
    %v631 = vld [vmem:[%s3 + $0x5c] sm:$0xf]
    %v632 = vld [vmem:[%s3 + $0x60] sm:$0xf]
    %v633 = vld [vmem:[%s3 + $0x64] sm:$0xf]
    %v634 = vld [vmem:[%s3 + $0x68] sm:$0xf]
    %v635 = vld [vmem:[%s3 + $0x6c] sm:$0xf]
    %v636 = vld [vmem:[%s3 + $0x70] sm:$0xf]
    %v637 = vld [vmem:[%s3 + $0x74] sm:$0xf]
    %v638 = vld [vmem:[%s3 + $0x78] sm:$0xf]
    %v639 = vld [vmem:[%s3 + $0x7c] sm:$0xf]
    %v640 = vld [vmem:[%s3 + $0x80] sm:$0xf]
    %v641 = vld [vmem:[%s3 + $0x84] sm:$0xf]
    %v642 = vld [vmem:[%s3 + $0x88] sm:$0xf]
    %v643 = vld [vmem:[%s3 + $0x8c] sm:$0xf]
    %v644 = vld [vmem:[%s4] sm:$0x1]
    %v646 = vlaneseq
    %v647 = vshrl.u32 %v646, 7
    %v648 = vsub.s32 0, %v647
    %v649 = vrot.slane %v644, %v648
    %v687 = vunpack.c.l.b16 %v608
    %v688 = vunpack.c.l.b16 %v609
    %v689 = vunpack.c.l.b16 %v610
    %v690 = vunpack.c.l.b16 %v611
    %v691 = vunpack.c.l.b16 %v612
    %v692 = vunpack.c.l.b16 %v613
    %v693 = vunpack.c.l.b16 %v614
    %v694 = vunpack.c.l.b16 %v615
    %v695 = vunpack.c.l.b16 %v616
    %v696 = vunpack.c.l.b16 %v617
    %v697 = vunpack.c.l.b16 %v618
    %v698 = vunpack.c.l.b16 %v619
    %v699 = vunpack.c.l.b16 %v620
    %v700 = vunpack.c.l.b16 %v621
    %v701 = vunpack.c.l.b16 %v622
    %v702 = vunpack.c.l.b16 %v623
    %v703 = vunpack.c.l.b16 %v624
    %v704 = vunpack.c.l.b16 %v625
    %v705 = vunpack.c.l.b16 %v626
    %v706 = vunpack.c.l.b16 %v627
    %v707 = vunpack.c.l.b16 %v628
    %v708 = vunpack.c.l.b16 %v629
    %v709 = vunpack.c.l.b16 %v630
    %v710 = vunpack.c.l.b16 %v631
    %v711 = vunpack.c.l.b16 %v632
    %v712 = vunpack.c.l.b16 %v633
    %v713 = vunpack.c.l.b16 %v634
    %v714 = vunpack.c.l.b16 %v635
    %v715 = vunpack.c.l.b16 %v636
    %v716 = vunpack.c.l.b16 %v637
    %v717 = vunpack.c.l.b16 %v638
    %v718 = vunpack.c.l.b16 %v639
    %v719 = vunpack.c.l.b16 %v640
    %v720 = vunpack.c.l.b16 %v641
    %v721 = vunpack.c.l.b16 %v642
    %v722 = vunpack.c.l.b16 %v643
    %v723 = vpack.c.b16 %v688, %v687
    %v724 = vpack.c.b16 %v690, %v689
    %v725 = vpack.c.b16 %v692, %v691
    %v726 = vpack.c.b16 %v694, %v693
    %v727 = vpack.c.b16 %v696, %v695
    %v728 = vpack.c.b16 %v698, %v697
    %v729 = vpack.c.b16 %v700, %v699
    %v730 = vpack.c.b16 %v702, %v701
    %v731 = vpack.c.b16 %v704, %v703
    %v732 = vpack.c.b16 %v706, %v705
    %v733 = vpack.c.b16 %v708, %v707
    %v734 = vpack.c.b16 %v710, %v709
    %v735 = vpack.c.b16 %v712, %v711
    %v736 = vpack.c.b16 %v714, %v713
    %v737 = vpack.c.b16 %v716, %v715
    %v738 = vpack.c.b16 %v718, %v717
    %v739 = vpack.c.b16 %v720, %v719
    %v740 = vpack.c.b16 %v722, %v721
    %v760 = vsel %vm430, %v607, 0
    %762 = vmatprep.subr.bf16.mxu0 0
    %763 = vmatpush1.bf16.msra.mxu0 %v723
    %764 = vmatprep.subr.bf16.mxu0 0
    %765 = vmatpush1.bf16.msra.mxu0 %v724
    %766 = vmatprep.subr.bf16.mxu0 0
    %767 = vmatpush1.bf16.msra.mxu0 %v725
    %768 = vmatprep.subr.bf16.mxu0 0
    %769 = vmatpush1.bf16.msra.mxu0 %v726
    %770 = vmatprep.subr.bf16.mxu0 0
    %771 = vmatpush1.bf16.msra.mxu0 %v727
    %772 = vmatprep.subr.bf16.mxu0 0
    %773 = vmatpush1.bf16.msra.mxu0 %v728
    %774 = vmatprep.subr.bf16.mxu0 0
    %775 = vmatpush1.bf16.msra.mxu0 %v729
    %776 = vmatprep.subr.bf16.mxu0 0
    %777 = vmatpush1.bf16.msra.mxu0 %v730
    %778 = vmatprep.subr.bf16.mxu0 0
    %779 = vmatpush1.bf16.msra.mxu0 %v731
    %780 = vmatprep.subr.bf16.mxu0 0
    %781 = vmatpush1.bf16.msra.mxu0 %v732
    %782 = vmatprep.subr.bf16.mxu0 0
    %783 = vmatpush1.bf16.msra.mxu0 %v733
    %784 = vmatprep.subr.bf16.mxu0 0
    %785 = vmatpush1.bf16.msra.mxu0 %v734
    %786 = vmatprep.subr.bf16.mxu0 0
    %787 = vmatpush1.bf16.msra.mxu0 %v735
    %788 = vmatprep.subr.bf16.mxu0 0
    %789 = vmatpush1.bf16.msra.mxu0 %v736
    %790 = vmatprep.subr.bf16.mxu0 0
    %791 = vmatpush1.bf16.msra.mxu0 %v737
    %792 = vmatprep.subr.bf16.mxu0 0
    %793 = vmatpush1.bf16.msra.mxu0 %v738
    %794 = vmatprep.mubr.bf16.mxu0 %v606
    %795 = vmatmul.mubr.bf16.gmra.mrb[0].mxu0 %v605
    %v796 = vpop.f32.mrb[0].mxu0
    %v797 = vadd.f32 %v649, %v796
    %v798 = vpop.f32.mrb[0].mxu0
    %v799 = vpop.f32.mrb[0].mxu0
    %v800 = vpop.f32.mrb[0].mxu0
    %801 = vdwg.mxu0
    %802 = vmatprep.subr.bf16.mxu0 0
    %803 = vmatpush1.bf16.msra.mxu0 %v739
    %804 = vmatprep.subr.bf16.mxu0 0
    %805 = vmatpush1.bf16.msra.mxu0 %v740
    %806 = vmatprep.subr.bf16.mxu0 0
    %807 = vmatpush1.bf16.msra.mxu0 0
    %808 = vmatprep.subr.bf16.mxu0 0
    %809 = vmatpush1.bf16.msra.mxu0 0
    %810 = vmatprep.subr.bf16.mxu0 0
    %811 = vmatpush1.bf16.msra.mxu0 0
    %812 = vmatprep.subr.bf16.mxu0 0
    %813 = vmatpush1.bf16.msra.mxu0 0
    %814 = vmatprep.subr.bf16.mxu0 0
    %815 = vmatpush1.bf16.msra.mxu0 0
    %816 = vmatprep.subr.bf16.mxu0 0
    %817 = vmatpush1.bf16.msra.mxu0 0
    %818 = vmatprep.subr.bf16.mxu0 0
    %819 = vmatpush1.bf16.msra.mxu0 0
    %820 = vmatprep.subr.bf16.mxu0 0
    %821 = vmatpush1.bf16.msra.mxu0 0
    %822 = vmatprep.subr.bf16.mxu0 0
    %823 = vmatpush1.bf16.msra.mxu0 0
    %824 = vmatprep.subr.bf16.mxu0 0
    %825 = vmatpush1.bf16.msra.mxu0 0
    %826 = vmatprep.subr.bf16.mxu0 0
    %827 = vmatpush1.bf16.msra.mxu0 0
    %828 = vmatprep.subr.bf16.mxu0 0
    %829 = vmatpush1.bf16.msra.mxu0 0
    %830 = vmatprep.subr.bf16.mxu0 0
    %831 = vmatpush1.bf16.msra.mxu0 0
    %832 = vmatprep.subr.bf16.mxu0 0
    %833 = vmatpush1.bf16.msra.mxu0 0
    %834 = vmatprep.mubr.bf16.mxu0 0
    %835 = vmatmul.mubr.bf16.gmra.mrb[0].mxu0 %v760
    %v836 = vpop.f32.mrb[0].mxu0
    %v837 = vadd.f32 %v797, %v836
    %v838 = vpop.f32.mrb[0].mxu0
    %v839 = vpop.f32.mrb[0].mxu0
    %v840 = vpop.f32.mrb[0].mxu0
    %841 = vdwg.mxu0
    %v842 = vld [vmem:[#allocation2] sm:$0xff]
    %v843 = vld [vmem:[#allocation2 + $0x8] sm:$0xff]
    %v844 = vld [vmem:[#allocation2 + $0x10] sm:$0xff]
    %v845 = vld [vmem:[#allocation2 + $0x18] sm:$0xff]
    %v846 = vld [vmem:[#allocation2 + $0x20] sm:$0xff]
    %v847 = vld [vmem:[#allocation2 + $0x28] sm:$0xff]
    %v848 = vld [vmem:[#allocation2 + $0x30] sm:$0xff]
    %v849 = vld [vmem:[#allocation2 + $0x38] sm:$0xff]
    %v850 = vld [vmem:[#allocation2 + $0x40] sm:$0xff]
    %v851 = vld [vmem:[#allocation2 + $0x48] sm:$0xff]
    %v852 = vld [vmem:[#allocation2 + $0x50] sm:$0xff]
    %v853 = vld [vmem:[#allocation2 + $0x58] sm:$0xff]
    %v854 = vld [vmem:[#allocation2 + $0x60] sm:$0xff]
    %v855 = vld [vmem:[#allocation2 + $0x68] sm:$0xff]
    %v856 = vld [vmem:[#allocation2 + $0x70] sm:$0xff]
    %v857 = vld [vmem:[#allocation2 + $0x78] sm:$0xff]
    %v858 = vld [vmem:[#allocation2 + $0x80] sm:$0xff]
    %v859 = vld [vmem:[#allocation2 + $0x88] sm:$0xff]
    %v860 = vld [vmem:[#allocation2 + $0x90] sm:$0xff]
    %v861 = vld [vmem:[#allocation2 + $0x98] sm:$0xff]
    %v862 = vld [vmem:[#allocation2 + $0xa0] sm:$0xff]
    %v863 = vld [vmem:[#allocation2 + $0xa8] sm:$0xff]
    %v864 = vld [vmem:[#allocation2 + $0xb0] sm:$0xff]
    %v865 = vld [vmem:[#allocation2 + $0xb8] sm:$0xff]
    %v866 = vld [vmem:[#allocation2 + $0xc0] sm:$0xff]
    %v867 = vld [vmem:[#allocation2 + $0xc8] sm:$0xff]
    %v868 = vld [vmem:[#allocation2 + $0xd0] sm:$0xff]
    %v869 = vld [vmem:[#allocation2 + $0xd8] sm:$0xff]
    %v870 = vld [vmem:[#allocation2 + $0xe0] sm:$0xff]
    %v871 = vld [vmem:[#allocation2 + $0xe8] sm:$0xff]
    %v872 = vld [vmem:[#allocation2 + $0xf0] sm:$0xff]
    %v873 = vld [vmem:[#allocation2 + $0xf8] sm:$0xff]
    %v874 = vld [vmem:[#allocation2 + $0x100] sm:$0xff]
    %v875 = vld [vmem:[#allocation2 + $0x108] sm:$0xff]
    %v876 = vld [vmem:[#allocation2 + $0x110] sm:$0xff]
    %v877 = vld [vmem:[#allocation2 + $0x118] sm:$0xff]
    %v878 = vld [vmem:[%s6] sm:$0x3]
    %v880 = vlaneseq
    %v881 = vshrl.u32 %v880, 7
    %v882 = vsub.s32 0, %v881
    %v883 = vrot.slane %v878, %v882
    %v884 = vlaneseq
    %v885 = vshrl.u32 %v884, 7
    %v886 = vsub.s32 1, %v885
    %v887 = vrot.slane %v878, %v886
    %v926 = vunpack.c.l.b16 %v842
    %v927 = vunpack.c.h.b16 %v842
    %v928 = vunpack.c.l.b16 %v843
    %v929 = vunpack.c.h.b16 %v843
    %v930 = vunpack.c.l.b16 %v844
    %v931 = vunpack.c.h.b16 %v844
    %v932 = vunpack.c.l.b16 %v845
    %v933 = vunpack.c.h.b16 %v845
    %v934 = vunpack.c.l.b16 %v846
    %v935 = vunpack.c.h.b16 %v846
    %v936 = vunpack.c.l.b16 %v847
    %v937 = vunpack.c.h.b16 %v847
    %v938 = vunpack.c.l.b16 %v848
    %v939 = vunpack.c.h.b16 %v848
    %v940 = vunpack.c.l.b16 %v849
    %v941 = vunpack.c.h.b16 %v849
    %v942 = vunpack.c.l.b16 %v850
    %v943 = vunpack.c.h.b16 %v850
    %v944 = vunpack.c.l.b16 %v851
    %v945 = vunpack.c.h.b16 %v851
    %v946 = vunpack.c.l.b16 %v852
    %v947 = vunpack.c.h.b16 %v852
    %v948 = vunpack.c.l.b16 %v853
    %v949 = vunpack.c.h.b16 %v853
    %v950 = vunpack.c.l.b16 %v854
    %v951 = vunpack.c.h.b16 %v854
    %v952 = vunpack.c.l.b16 %v855
    %v953 = vunpack.c.h.b16 %v855
    %v954 = vunpack.c.l.b16 %v856
    %v955 = vunpack.c.h.b16 %v856
    %v956 = vunpack.c.l.b16 %v857
    %v957 = vunpack.c.h.b16 %v857
    %v958 = vunpack.c.l.b16 %v858
    %v959 = vunpack.c.h.b16 %v858
    %v960 = vunpack.c.l.b16 %v859
    %v961 = vunpack.c.h.b16 %v859
    %v962 = vunpack.c.l.b16 %v860
    %v963 = vunpack.c.h.b16 %v860
    %v964 = vunpack.c.l.b16 %v861
    %v965 = vunpack.c.h.b16 %v861
    %v966 = vunpack.c.l.b16 %v862
    %v967 = vunpack.c.h.b16 %v862
    %v968 = vunpack.c.l.b16 %v863
    %v969 = vunpack.c.h.b16 %v863
    %v970 = vunpack.c.l.b16 %v864
    %v971 = vunpack.c.h.b16 %v864
    %v972 = vunpack.c.l.b16 %v865
    %v973 = vunpack.c.h.b16 %v865
    %v974 = vunpack.c.l.b16 %v866
    %v975 = vunpack.c.h.b16 %v866
    %v976 = vunpack.c.l.b16 %v867
    %v977 = vunpack.c.h.b16 %v867
    %v978 = vunpack.c.l.b16 %v868
    %v979 = vunpack.c.h.b16 %v868
    %v980 = vunpack.c.l.b16 %v869
    %v981 = vunpack.c.h.b16 %v869
    %v982 = vunpack.c.l.b16 %v870
    %v983 = vunpack.c.h.b16 %v870
    %v984 = vunpack.c.l.b16 %v871
    %v985 = vunpack.c.h.b16 %v871
    %v986 = vunpack.c.l.b16 %v872
    %v987 = vunpack.c.h.b16 %v872
    %v988 = vunpack.c.l.b16 %v873
    %v989 = vunpack.c.h.b16 %v873
    %v990 = vunpack.c.l.b16 %v874
    %v991 = vunpack.c.h.b16 %v874
    %v992 = vunpack.c.l.b16 %v875
    %v993 = vunpack.c.h.b16 %v875
    %v994 = vunpack.c.l.b16 %v876
    %v995 = vunpack.c.h.b16 %v876
    %v996 = vunpack.c.l.b16 %v877
    %v997 = vunpack.c.h.b16 %v877
    %v998 = vpack.c.b16 %v928, %v926
    %v999 = vpack.c.b16 %v929, %v927
    %v1000 = vpack.c.b16 %v932, %v930
    %v1001 = vpack.c.b16 %v933, %v931
    %v1002 = vpack.c.b16 %v936, %v934
    %v1003 = vpack.c.b16 %v937, %v935
    %v1004 = vpack.c.b16 %v940, %v938
    %v1005 = vpack.c.b16 %v941, %v939
    %v1006 = vpack.c.b16 %v944, %v942
    %v1007 = vpack.c.b16 %v945, %v943
    %v1008 = vpack.c.b16 %v948, %v946
    %v1009 = vpack.c.b16 %v949, %v947
    %v1010 = vpack.c.b16 %v952, %v950
    %v1011 = vpack.c.b16 %v953, %v951
    %v1012 = vpack.c.b16 %v956, %v954
    %v1013 = vpack.c.b16 %v957, %v955
    %v1014 = vpack.c.b16 %v960, %v958
    %v1015 = vpack.c.b16 %v961, %v959
    %v1016 = vpack.c.b16 %v964, %v962
    %v1017 = vpack.c.b16 %v965, %v963
    %v1018 = vpack.c.b16 %v968, %v966
    %v1019 = vpack.c.b16 %v969, %v967
    %v1020 = vpack.c.b16 %v972, %v970
    %v1021 = vpack.c.b16 %v973, %v971
    %v1022 = vpack.c.b16 %v976, %v974
    %v1023 = vpack.c.b16 %v977, %v975
    %v1024 = vpack.c.b16 %v980, %v978
    %v1025 = vpack.c.b16 %v981, %v979
    %v1026 = vpack.c.b16 %v984, %v982
    %v1027 = vpack.c.b16 %v985, %v983
    %v1028 = vpack.c.b16 %v988, %v986
    %v1029 = vpack.c.b16 %v989, %v987
    %v1030 = vpack.c.b16 %v992, %v990
    %v1031 = vpack.c.b16 %v993, %v991
    %v1032 = vpack.c.b16 %v996, %v994
    %v1033 = vpack.c.b16 %v997, %v995
    %1070 = vmatprep.subr.bf16.mxu0 %v999
    %1071 = vmatpush1.bf16.msra.mxu0 %v998
    %1072 = vmatprep.subr.bf16.mxu0 %v1001
    %1073 = vmatpush1.bf16.msra.mxu0 %v1000
    %1074 = vmatprep.subr.bf16.mxu0 %v1003
    %1075 = vmatpush1.bf16.msra.mxu0 %v1002
    %1076 = vmatprep.subr.bf16.mxu0 %v1005
    %1077 = vmatpush1.bf16.msra.mxu0 %v1004
    %1078 = vmatprep.subr.bf16.mxu0 %v1007
    %1079 = vmatpush1.bf16.msra.mxu0 %v1006
    %1080 = vmatprep.subr.bf16.mxu0 %v1009
    %1081 = vmatpush1.bf16.msra.mxu0 %v1008
    %1082 = vmatprep.subr.bf16.mxu0 %v1011
    %1083 = vmatpush1.bf16.msra.mxu0 %v1010
    %1084 = vmatprep.subr.bf16.mxu0 %v1013
    %1085 = vmatpush1.bf16.msra.mxu0 %v1012
    %1086 = vmatprep.subr.bf16.mxu0 %v1015
    %1087 = vmatpush1.bf16.msra.mxu0 %v1014
    %1088 = vmatprep.subr.bf16.mxu0 %v1017
    %1089 = vmatpush1.bf16.msra.mxu0 %v1016
    %1090 = vmatprep.subr.bf16.mxu0 %v1019
    %1091 = vmatpush1.bf16.msra.mxu0 %v1018
    %1092 = vmatprep.subr.bf16.mxu0 %v1021
    %1093 = vmatpush1.bf16.msra.mxu0 %v1020
    %1094 = vmatprep.subr.bf16.mxu0 %v1023
    %1095 = vmatpush1.bf16.msra.mxu0 %v1022
    %1096 = vmatprep.subr.bf16.mxu0 %v1025
    %1097 = vmatpush1.bf16.msra.mxu0 %v1024
    %1098 = vmatprep.subr.bf16.mxu0 %v1027
    %1099 = vmatpush1.bf16.msra.mxu0 %v1026
    %1100 = vmatprep.subr.bf16.mxu0 %v1029
    %1101 = vmatpush1.bf16.msra.mxu0 %v1028
    %1102 = vmatprep.mubr.bf16.mxu0 %v606
    %1103 = vmatmul.mubr.bf16.gmra.mrb[0].mxu0 %v605
    %v1104 = vpop.f32.mrb[0].mxu0
    %v1105 = vadd.f32 %v883, %v1104
    %v1106 = vpop.f32.mrb[0].mxu0
    %v1107 = vadd.f32 %v887, %v1106
    %v1108 = vpop.f32.mrb[0].mxu0
    %v1109 = vpop.f32.mrb[0].mxu0
    %1110 = vdwg.mxu0
    %1111 = vmatprep.subr.bf16.mxu0 %v1031
    %1112 = vmatpush1.bf16.msra.mxu0 %v1030
    %1113 = vmatprep.subr.bf16.mxu0 %v1033
    %1114 = vmatpush1.bf16.msra.mxu0 %v1032
    %1115 = vmatprep.subr.bf16.mxu0 0
    %1116 = vmatpush1.bf16.msra.mxu0 0
    %1117 = vmatprep.subr.bf16.mxu0 0
    %1118 = vmatpush1.bf16.msra.mxu0 0
    %1119 = vmatprep.subr.bf16.mxu0 0
    %1120 = vmatpush1.bf16.msra.mxu0 0
    %1121 = vmatprep.subr.bf16.mxu0 0
    %1122 = vmatpush1.bf16.msra.mxu0 0
    %1123 = vmatprep.subr.bf16.mxu0 0
    %1124 = vmatpush1.bf16.msra.mxu0 0
    %1125 = vmatprep.subr.bf16.mxu0 0
    %1126 = vmatpush1.bf16.msra.mxu0 0
    %1127 = vmatprep.subr.bf16.mxu0 0
    %1128 = vmatpush1.bf16.msra.mxu0 0
    %1129 = vmatprep.subr.bf16.mxu0 0
    %1130 = vmatpush1.bf16.msra.mxu0 0
    %1131 = vmatprep.subr.bf16.mxu0 0
    %1132 = vmatpush1.bf16.msra.mxu0 0
    %1133 = vmatprep.subr.bf16.mxu0 0
    %1134 = vmatpush1.bf16.msra.mxu0 0
    %1135 = vmatprep.subr.bf16.mxu0 0
    %1136 = vmatpush1.bf16.msra.mxu0 0
    %1137 = vmatprep.subr.bf16.mxu0 0
    %1138 = vmatpush1.bf16.msra.mxu0 0
    %1139 = vmatprep.subr.bf16.mxu0 0
    %1140 = vmatpush1.bf16.msra.mxu0 0
    %1141 = vmatprep.subr.bf16.mxu0 0
    %1142 = vmatpush1.bf16.msra.mxu0 0
    %1143 = vmatprep.mubr.bf16.mxu0 0
    %1144 = vmatmul.mubr.bf16.gmra.mrb[0].mxu0 %v760
    %v1145 = vpop.f32.mrb[0].mxu0
    %v1146 = vadd.f32 %v1105, %v1145
    %v1147 = vpop.f32.mrb[0].mxu0
    %v1148 = vadd.f32 %v1107, %v1147
    %v1149 = vpop.f32.mrb[0].mxu0
    %v1150 = vpop.f32.mrb[0].mxu0
    %1151 = vdwg.mxu0
    %vm1152 = vcmp.gt.f32.partialorder %v1146, 0.0
    %vm1153 = vcmp.gt.f32.partialorder %v1148, 0.0
    %v1154 = vmul.f32 %v1146, 0.2
    %v1155 = vmul.f32 %v1148, 0.2
    %v1156 = vsel %vm1152, %v1146, %v1154
    %v1157 = vsel %vm1153, %v1148, %v1155
    %v1158 = vpack.c.bf16 %v1156, %v1156
    %v1159 = vpack.c.bf16 %v1157, %v1157
    %v1160 = vld [vmem:[%s7] sm:$0xf]
    %v1161 = vld [vmem:[%s7 + $0x4] sm:$0xf]
    %v1162 = vld [vmem:[%s7 + $0x8] sm:$0xf]
    %v1163 = vld [vmem:[%s7 + $0xc] sm:$0xf]
    %v1164 = vld [vmem:[%s7 + $0x10] sm:$0xf]
    %v1165 = vld [vmem:[%s7 + $0x14] sm:$0xf]
    %v1166 = vld [vmem:[%s7 + $0x18] sm:$0xf]
    %v1167 = vld [vmem:[%s7 + $0x1c] sm:$0xf]
    %v1168 = vld [vmem:[%s7 + $0x20] sm:$0xf]
    %v1169 = vld [vmem:[%s7 + $0x24] sm:$0xf]
    %v1170 = vld [vmem:[%s7 + $0x28] sm:$0xf]
    %v1171 = vld [vmem:[%s7 + $0x2c] sm:$0xf]
    %v1172 = vld [vmem:[%s7 + $0x30] sm:$0xf]
    %v1173 = vld [vmem:[%s7 + $0x34] sm:$0xf]
    %v1174 = vld [vmem:[%s7 + $0x38] sm:$0xf]
    %v1175 = vld [vmem:[%s7 + $0x3c] sm:$0xf]
    %v1176 = vld [vmem:[%s7 + $0x40] sm:$0xf]
    %v1177 = vld [vmem:[%s7 + $0x44] sm:$0xf]
    %v1178 = vld [vmem:[%s7 + $0x48] sm:$0xf]
    %v1179 = vld [vmem:[%s7 + $0x4c] sm:$0xf]
    %v1180 = vld [vmem:[%s7 + $0x50] sm:$0xf]
    %v1181 = vld [vmem:[%s7 + $0x54] sm:$0xf]
    %v1182 = vld [vmem:[%s7 + $0x58] sm:$0xf]
    %v1183 = vld [vmem:[%s7 + $0x5c] sm:$0xf]
    %v1184 = vld [vmem:[%s8] sm:$0x1]
    %v1186 = vlaneseq
    %v1187 = vshrl.u32 %v1186, 7
    %v1188 = vsub.s32 0, %v1187
    %v1189 = vrot.slane %v1184, %v1188
    %v1215 = vunpack.c.l.b16 %v1160
    %v1216 = vunpack.c.l.b16 %v1161
    %v1217 = vunpack.c.l.b16 %v1162
    %v1218 = vunpack.c.l.b16 %v1163
    %v1219 = vunpack.c.l.b16 %v1164
    %v1220 = vunpack.c.l.b16 %v1165
    %v1221 = vunpack.c.l.b16 %v1166
    %v1222 = vunpack.c.l.b16 %v1167
    %v1223 = vunpack.c.l.b16 %v1168
    %v1224 = vunpack.c.l.b16 %v1169
    %v1225 = vunpack.c.l.b16 %v1170
    %v1226 = vunpack.c.l.b16 %v1171
    %v1227 = vunpack.c.l.b16 %v1172
    %v1228 = vunpack.c.l.b16 %v1173
    %v1229 = vunpack.c.l.b16 %v1174
    %v1230 = vunpack.c.l.b16 %v1175
    %v1231 = vunpack.c.l.b16 %v1176
    %v1232 = vunpack.c.l.b16 %v1177
    %v1233 = vunpack.c.l.b16 %v1178
    %v1234 = vunpack.c.l.b16 %v1179
    %v1235 = vunpack.c.l.b16 %v1180
    %v1236 = vunpack.c.l.b16 %v1181
    %v1237 = vunpack.c.l.b16 %v1182
    %v1238 = vunpack.c.l.b16 %v1183
    %v1239 = vpack.c.b16 %v1216, %v1215
    %v1240 = vpack.c.b16 %v1218, %v1217
    %v1241 = vpack.c.b16 %v1220, %v1219
    %v1242 = vpack.c.b16 %v1222, %v1221
    %v1243 = vpack.c.b16 %v1224, %v1223
    %v1244 = vpack.c.b16 %v1226, %v1225
    %v1245 = vpack.c.b16 %v1228, %v1227
    %v1246 = vpack.c.b16 %v1230, %v1229
    %v1247 = vpack.c.b16 %v1232, %v1231
    %v1248 = vpack.c.b16 %v1234, %v1233
    %v1249 = vpack.c.b16 %v1236, %v1235
    %v1250 = vpack.c.b16 %v1238, %v1237
    %vm1263 = vcmask 523264
    %v1265 = vsel %vm1263, %v1159, 0
    %1267 = vmatprep.subr.bf16.mxu0 0
    %1268 = vmatpush1.bf16.msra.mxu0 %v1239
    %1269 = vmatprep.subr.bf16.mxu0 0
    %1270 = vmatpush1.bf16.msra.mxu0 %v1240
    %1271 = vmatprep.subr.bf16.mxu0 0
    %1272 = vmatpush1.bf16.msra.mxu0 %v1241
    %1273 = vmatprep.subr.bf16.mxu0 0
    %1274 = vmatpush1.bf16.msra.mxu0 %v1242
    %1275 = vmatprep.subr.bf16.mxu0 0
    %1276 = vmatpush1.bf16.msra.mxu0 %v1243
    %1277 = vmatprep.subr.bf16.mxu0 0
    %1278 = vmatpush1.bf16.msra.mxu0 %v1244
    %1279 = vmatprep.subr.bf16.mxu0 0
    %1280 = vmatpush1.bf16.msra.mxu0 %v1245
    %1281 = vmatprep.subr.bf16.mxu0 0
    %1282 = vmatpush1.bf16.msra.mxu0 %v1246
    %1283 = vmatprep.subr.bf16.mxu0 0
    %1284 = vmatpush1.bf16.msra.mxu0 %v1247
    %1285 = vmatprep.subr.bf16.mxu0 0
    %1286 = vmatpush1.bf16.msra.mxu0 %v1248
    %1287 = vmatprep.subr.bf16.mxu0 0
    %1288 = vmatpush1.bf16.msra.mxu0 %v1249
    %1289 = vmatprep.subr.bf16.mxu0 0
    %1290 = vmatpush1.bf16.msra.mxu0 %v1250
    %1291 = vmatprep.subr.bf16.mxu0 0
    %1292 = vmatpush1.bf16.msra.mxu0 0
    %1293 = vmatprep.subr.bf16.mxu0 0
    %1294 = vmatpush1.bf16.msra.mxu0 0
    %1295 = vmatprep.subr.bf16.mxu0 0
    %1296 = vmatpush1.bf16.msra.mxu0 0
    %1297 = vmatprep.subr.bf16.mxu0 0
    %1298 = vmatpush1.bf16.msra.mxu0 0
    %1299 = vmatprep.mubr.bf16.mxu0 %v1265
    %1300 = vmatmul.mubr.bf16.gmra.mrb[0].mxu0 %v1158
    %v1301 = vpop.f32.mrb[0].mxu0
    %v1302 = vadd.f32 %v1189, %v1301
    %v1303 = vpop.f32.mrb[0].mxu0
    %v1304 = vpop.f32.mrb[0].mxu0
    %v1305 = vpop.f32.mrb[0].mxu0
    %1306 = vdwg.mxu0
    %1308 = vrot.lane.b32.xlu0 %v837, 64
    %v1309 = vpop.permute.xlu0 %1308
    %1312 = vrot.lane.b32.xlu0 %v1302, 112
    %v1313 = vpop.permute.xlu0 %1312
    %v1315 = vsel %vm1263, %v1157, %v1309
    %vm1316 = vcmask 916480
    %v1317 = vsel %vm1316, %v1315, %v1313
    %vm1318 = vcmask 130048
    %v1319 = vsel %vm1318, %v1313, 0.0
    %1320 = vst [vmem:[%s9] sm:$0xff] %v1156
    %1321 = vst [vmem:[%s9 + $0x8] sm:$0xff] %v1317
    %1322 = vst [vmem:[%s9 + $0x10] sm:$0xff] %v1319
    // Predicated region
    $region42: #{encoder_forward.1} parent=1 // pred_check
      _
    $region43: #{encoder_forward.1} parent=1 // pred_check_branch
      %1324 = sbr.rel (0) target = $region45
    $region44: #{encoder_forward.1} parent=1 // pred_region
      _
    $region45: #{encoder_forward.1} parent=1 // pred_fallthru
      _
    // Predicated region
    $region46: #{encoder_forward.1} parent=1 // pred_check
      _
    $region47: #{encoder_forward.1} parent=1 // pred_check_branch
      %1326 = sbr.rel (0) target = $region49
    $region48: #{encoder_forward.1} parent=1 // pred_region
      _
    $region49: #{encoder_forward.1} parent=1 // pred_fallthru
      _
    %1327 = vsyncpa [#allocation3], 1

</llo_original>
